<compile_context>
chip_gen: v7x
topology: tpu7x:2x2x1
jax: 0.10.0
libtpu: 0.0.40
codegen_flags: <defaults>
</compile_context>

<pallas_src>
import functools

import jax
import jax.numpy as jnp
from jax.experimental import pallas as pl
from jax.experimental.pallas import tpu as pltpu


def _mlp_fused_kernel(*refs, n_layers, compute_dtype):
    # refs = (x_ref, w_1..w_n refs, bias_ref, o_ref)
    x_ref = refs[0]
    w_refs = refs[1:1 + n_layers]
    bias_ref = refs[1 + n_layers]          # (n_layers, 128) packed f32, zero-padded
    o_ref = refs[2 + n_layers]

    h = x_ref[...]                         # (tile_b, in_dim) f32
    for i in range(n_layers):
        w = w_refs[i][...]                 # (in_i, out_i), resident in VMEM (bf16)
        out_dim = w.shape[1]
        # bf16 MXU operands, f32 accumulation; bias/ReLU epilogue stays f32.
        h = jnp.dot(h.astype(compute_dtype), w.astype(compute_dtype),
                    preferred_element_type=jnp.float32)
        h = h + bias_ref[i:i + 1, :out_dim]          # broadcast bias over rows
        if i < n_layers - 1:                          # last block: activation='none'
            h = jnp.maximum(h, 0.0)
    o_ref[...] = h if h.dtype == o_ref.dtype else h.astype(o_ref.dtype)


def _choose_tile_b(B, cap=2048, min_tiles=2):
    """Batch tile: full batch when tiny; otherwise a multiple of 8 that yields
    at least `min_tiles` grid steps (keeps both v7x TensorCores busy), capped so
    the double-buffered f32 input block stays well inside per-TC VMEM."""
    if B <= 8:
        return B                                  # single full-extent block
    t = -(-B // min_tiles)                        # cdiv(B, min_tiles)
    t = ((t + 7) // 8) * 8                        # (8,128) sublane constraint
    return max(8, min(cap, t))


def mlp_forward_fused(x_flat, weights, bias_packed, *, tile_b=None,
                      compute_dtype=jnp.bfloat16):
    """Fused 3-layer MLP forward.  x_flat: (B, in_dim) f32; weights: (in, out) each."""
    B, in_dim = x_flat.shape
    n_layers = len(weights)
    out_dim = int(weights[-1].shape[1])

    if tile_b is None:
        tile_b = _choose_tile_b(B)
    if tile_b >= B:
        tile_b = B                                 # full-extent block, no constraint
    elif tile_b % 8:
        tile_b = ((tile_b + 7) // 8) * 8           # guard user-supplied tile_b
    n_tiles = pl.cdiv(B, tile_b)                   # ragged last block handled by Pallas

    x_bytes = jnp.dtype(x_flat.dtype).itemsize
    w_bytes = sum(int(w.size) * jnp.dtype(w.dtype).itemsize for w in weights)
    b_bytes = int(bias_packed.size) * jnp.dtype(bias_packed.dtype).itemsize

    # Explicit scoped-VMEM budget: 2x (double-buffer) per streamed/resident block,
    # plus slack for in-kernel intermediates and internal scratch.
    vmem_bytes = (2 * tile_b * in_dim * x_bytes
                  + 2 * tile_b * out_dim * x_bytes
                  + 2 * w_bytes + 2 * b_bytes)
    vmem_bytes = int(vmem_bytes * 1.25) + (2 << 20)
    vmem_bytes = min(max(vmem_bytes, 16 << 20), 48 << 20)   # v5e floor / v7x ceiling

    flops = 2 * B * sum(int(w.shape[0]) * int(w.shape[1]) for w in weights)
    bytes_accessed = B * in_dim * x_bytes + w_bytes + b_bytes + B * out_dim * x_bytes
    cost = pl.CostEstimate(flops=flops, transcendentals=0,
                           bytes_accessed=bytes_accessed)

    kernel = functools.partial(_mlp_fused_kernel, n_layers=n_layers,
                               compute_dtype=compute_dtype)

    in_specs = [pl.BlockSpec((tile_b, in_dim), lambda i: (i, 0))]       # batch-tiled
    for w in weights:                                                   # resident
        in_specs.append(pl.BlockSpec(w.shape, lambda i: (0, 0)))
    in_specs.append(pl.BlockSpec(bias_packed.shape, lambda i: (0, 0)))  # resident

    return pl.pallas_call(
        kernel,
        out_shape=jax.ShapeDtypeStruct((B, out_dim), x_flat.dtype),
        grid=(n_tiles,),
        in_specs=in_specs,
        out_specs=pl.BlockSpec((tile_b, out_dim), lambda i: (i, 0)),
        compiler_params=pltpu.CompilerParams(
            dimension_semantics=("parallel",),      # shard rows across v7x's 2 TCs
            vmem_limit_bytes=vmem_bytes),
        cost_estimate=cost,
    )(x_flat, *weights, bias_packed)


def pack_biases(biases, lane_pad=128):
    """Pack per-layer 1-D biases into one zero-padded (n_layers, >=128) f32 array."""
    n = len(biases)
    max_dim = max(int(b.shape[0]) for b in biases)
    width = max(lane_pad, ((max_dim + lane_pad - 1) // lane_pad) * lane_pad)
    packed = jnp.zeros((n, width), biases[0].dtype)
    for i, b in enumerate(biases):
        packed = packed.at[i, :b.shape[0]].set(b)
    return packed


def init_mlp_params(key, input_dim, output_dim, dim, n_blk, dtype=jnp.float32):
    """nn.Linear-style init: U(-1/sqrt(fan_in), +1/sqrt(fan_in)); W stored (in, out)."""
    dims = [input_dim] + [dim] * (n_blk - 1) + [output_dim]
    weights, biases = [], []
    for i in range(n_blk):
        fan_in, fan_out = dims[i], dims[i + 1]
        key, kw, kb = jax.random.split(key, 3)
        bound = 1.0 / (fan_in ** 0.5)
        weights.append(jax.random.uniform(kw, (fan_in, fan_out), dtype, -bound, bound))
        biases.append(jax.random.uniform(kb, (fan_out,), dtype, -bound, bound))
    return tuple(weights), tuple(biases)


@jax.jit
def mlp_forward(x_nchw, weights, bias_packed):
    B = x_nchw.shape[0]
    h = x_nchw.reshape(B, -1)              # x.view(x.size(0), -1)
    return mlp_forward_fused(h, weights, bias_packed)


if __name__ == "__main__":
    key = jax.random.PRNGKey(0)
    kx, kp = jax.random.split(key)

    B, C, H, W = 2, 4, 16, 16
    input_dim = C * H * W                  # 1024
    output_dim = 8
    dim = 32
    n_blk = 3

    x = jax.random.normal(kx, (B, C, H, W), jnp.float32)
    weights_f32, biases = init_mlp_params(kp, input_dim, output_dim, dim, n_blk)
    weights = tuple(w.astype(jnp.bfloat16) for w in weights_f32)   # bf16 MXU operands
    bias_packed = pack_biases(biases)

    out = mlp_forward(x, weights, bias_packed)
    jax.block_until_ready(out)
    assert out.shape == (B, output_dim), out.shape

    # plain-JAX reference following the same math path (bf16 dot operands,
    # f32 accumulation, f32 bias/ReLU epilogue)
    ref = x.reshape(B, -1)
    for i, (w, b) in enumerate(zip(weights, biases)):
        ref = jnp.dot(ref.astype(jnp.bfloat16), w,
                      preferred_element_type=jnp.float32) + b
        if i < n_blk - 1:
            ref = jnp.maximum(ref, 0.0)
    assert jnp.allclose(out, ref, atol=1e-3, rtol=1e-3), (out, ref)

    print("KERNEL_OK")
</pallas_src>

<mosaic_0001>
module attributes {stable_mosaic.version = 11 : i64} {
  func.func @_mlp_fused_kernel(%arg0: i32, %arg1: memref<2x1024xf32, #tpu.memory_space<vmem>>, %arg2: memref<1024x32xbf16, #tpu.memory_space<vmem>>, %arg3: memref<32x32xbf16, #tpu.memory_space<vmem>>, %arg4: memref<32x8xbf16, #tpu.memory_space<vmem>>, %arg5: memref<3x128xf32, #tpu.memory_space<vmem>>, %arg6: memref<2x8xf32, #tpu.memory_space<vmem>>) attributes {dimension_semantics = [#tpu.dimension_semantics<parallel>], iteration_bounds = array<i64: 1>, scalar_prefetch = 0 : i64, scratch_operands = 0 : i64, tpu.core_type = #tpu.core_type<tc>, window_params = [{transform_indices = @transform_0, window_bounds = array<i64: 2, 1024>}, {pipeline_mode = #tpu.pipeline_mode<synchronous>, transform_indices = @transform_1, window_bounds = array<i64: 1024, 32>}, {pipeline_mode = #tpu.pipeline_mode<synchronous>, transform_indices = @transform_2, window_bounds = array<i64: 32, 32>}, {pipeline_mode = #tpu.pipeline_mode<synchronous>, transform_indices = @transform_3, window_bounds = array<i64: 32, 8>}, {pipeline_mode = #tpu.pipeline_mode<synchronous>, transform_indices = @transform_4, window_bounds = array<i64: 3, 128>}, {transform_indices = @transform_5, window_bounds = array<i64: 2, 8>}]} {
    %c0 = arith.constant 0 : index
    %c0_0 = arith.constant 0 : index
    %0 = vector.load %arg1[%c0, %c0_0] : memref<2x1024xf32, #tpu.memory_space<vmem>>, vector<2x1024xf32>
    %c0_1 = arith.constant 0 : index
    %c0_2 = arith.constant 0 : index
    %1 = vector.load %arg2[%c0_1, %c0_2] : memref<1024x32xbf16, #tpu.memory_space<vmem>>, vector<1024x32xbf16>
    %2 = arith.truncf %0 : vector<2x1024xf32> to vector<2x1024xbf16>
    %cst = arith.constant dense<0.000000e+00> : vector<2x32xf32>
    %3 = tpu.matmul %2, %1, %cst {dimension_numbers = #tpu.dot_dimension_numbers<[1], [0], [0], [1], [0, 0, 1, 1], [], []>} : vector<2x1024xbf16>, vector<1024x32xbf16>, vector<2x32xf32> -> vector<2x32xf32>
    %c0_3 = arith.constant 0 : index
    %c0_4 = arith.constant 0 : index
    %4 = vector.load %arg5[%c0_3, %c0_4] : memref<3x128xf32, #tpu.memory_space<vmem>>, vector<1x32xf32>
    %5 = vector.broadcast %4 : vector<1x32xf32> to vector<2x32xf32>
    %6 = arith.addf %3, %5 : vector<2x32xf32>
    %cst_5 = arith.constant 0.000000e+00 : f32
    %7 = vector.broadcast %cst_5 : f32 to vector<2x32xf32>
    %8 = arith.maximumf %6, %7 : vector<2x32xf32>
    %c0_6 = arith.constant 0 : index
    %c0_7 = arith.constant 0 : index
    %9 = vector.load %arg3[%c0_6, %c0_7] : memref<32x32xbf16, #tpu.memory_space<vmem>>, vector<32x32xbf16>
    %10 = arith.truncf %8 : vector<2x32xf32> to vector<2x32xbf16>
    %cst_8 = arith.constant dense<0.000000e+00> : vector<2x32xf32>
    %11 = tpu.matmul %10, %9, %cst_8 {dimension_numbers = #tpu.dot_dimension_numbers<[1], [0], [0], [1], [0, 0, 1, 1], [], []>} : vector<2x32xbf16>, vector<32x32xbf16>, vector<2x32xf32> -> vector<2x32xf32>
    %c1 = arith.constant 1 : index
    %c0_9 = arith.constant 0 : index
    %12 = vector.load %arg5[%c1, %c0_9] : memref<3x128xf32, #tpu.memory_space<vmem>>, vector<1x32xf32>
    %13 = vector.broadcast %12 : vector<1x32xf32> to vector<2x32xf32>
    %14 = arith.addf %11, %13 : vector<2x32xf32>
    %cst_10 = arith.constant 0.000000e+00 : f32
    %15 = vector.broadcast %cst_10 : f32 to vector<2x32xf32>
    %16 = arith.maximumf %14, %15 : vector<2x32xf32>
    %c0_11 = arith.constant 0 : index
    %c0_12 = arith.constant 0 : index
    %17 = vector.load %arg4[%c0_11, %c0_12] : memref<32x8xbf16, #tpu.memory_space<vmem>>, vector<32x8xbf16>
    %18 = arith.truncf %16 : vector<2x32xf32> to vector<2x32xbf16>
    %cst_13 = arith.constant dense<0.000000e+00> : vector<2x8xf32>
    %19 = tpu.matmul %18, %17, %cst_13 {dimension_numbers = #tpu.dot_dimension_numbers<[1], [0], [0], [1], [0, 0, 1, 1], [], []>} : vector<2x32xbf16>, vector<32x8xbf16>, vector<2x8xf32> -> vector<2x8xf32>
    %c2 = arith.constant 2 : index
    %c0_14 = arith.constant 0 : index
    %20 = vector.load %arg5[%c2, %c0_14] : memref<3x128xf32, #tpu.memory_space<vmem>>, vector<1x8xf32>
    %21 = vector.broadcast %20 : vector<1x8xf32> to vector<2x8xf32>
    %22 = arith.addf %19, %21 : vector<2x8xf32>
    %c0_15 = arith.constant 0 : index
    %c0_16 = arith.constant 0 : index
    %23 = vector.load %arg6[%c0_15, %c0_16] : memref<2x8xf32, #tpu.memory_space<vmem>>, vector<2x8xf32>
    tpu.vector_store %arg6[%c0_15, %c0_16], %22 {strides = array<i32>} : memref<2x8xf32, #tpu.memory_space<vmem>>, vector<2x8xf32>,
    return
  }
  func.func @transform_0(%arg0: i32) -> (i32, i32) {
    %c0_i32 = arith.constant 0 : i32
    %c0_i32_0 = arith.constant 0 : i32
    return %arg0, %c0_i32 : i32, i32
  }
  func.func @transform_1(%arg0: i32) -> (i32, i32) {
    %c0_i32 = arith.constant 0 : i32
    %c0_i32_0 = arith.constant 0 : i32
    %c0_i32_1 = arith.constant 0 : i32
    return %c0_i32, %c0_i32_0 : i32, i32
  }
  func.func @transform_2(%arg0: i32) -> (i32, i32) {
    %c0_i32 = arith.constant 0 : i32
    %c0_i32_0 = arith.constant 0 : i32
    %c0_i32_1 = arith.constant 0 : i32
    return %c0_i32, %c0_i32_0 : i32, i32
  }
  func.func @transform_3(%arg0: i32) -> (i32, i32) {
    %c0_i32 = arith.constant 0 : i32
    %c0_i32_0 = arith.constant 0 : i32
    %c0_i32_1 = arith.constant 0 : i32
    return %c0_i32, %c0_i32_0 : i32, i32
  }
  func.func @transform_4(%arg0: i32) -> (i32, i32) {
    %c0_i32 = arith.constant 0 : i32
    %c0_i32_0 = arith.constant 0 : i32
    %c0_i32_1 = arith.constant 0 : i32
    return %c0_i32, %c0_i32_0 : i32, i32
  }
  func.func @transform_5(%arg0: i32) -> (i32, i32) {
    %c0_i32 = arith.constant 0 : i32
    %c0_i32_0 = arith.constant 0 : i32
    return %arg0, %c0_i32 : i32, i32
  }
}

</mosaic_0001>

<llo_original>
// kernel: mlp_forward.1
$region0: #{mlp_forward.1}
  #allocation0 [shape = 'u32[]', space=smem, size = 0x4, offset = 0x4, fixed_abs, tag = 'smem constant byte address 0x4 - core index']
  #allocation1 [shape = 'u32[144,128]{1,0:T(1,128)}', space=vmem, size = 0x12000, scoped, tag = 'internal scratch']
  %s0 = inlined_call_operand.vmem [shape: f32[2,1024], index: 0, kind: input, shape index: {}]
  %s1 = inlined_call_operand.vmem [shape: bf16[1024,32], index: 1, kind: input, shape index: {}]
  %s2 = inlined_call_operand.vmem [shape: bf16[32,32], index: 2, kind: input, shape index: {}]
  %s3 = inlined_call_operand.vmem [shape: bf16[32,8], index: 3, kind: input, shape index: {}]
  %s4 = inlined_call_operand.vmem [shape: f32[3,128], index: 4, kind: input, shape index: {}]
  %s5 = inlined_call_operand.hbm [shape: f32[2,8], index: 5, kind: output, shape index: {}]
  %s6 = sld [smem:[#allocation0]]
  $region30: #{mlp_forward.1} parent=0
    _
  %s8 = ssub.s32 1, %s6
  %s9 = scalar_select 0, %s8, %s6
  $region1: #{mlp_forward.1} parent=0
    #allocation2 [shape = 'u8[1024]{0}', space=vmem, size = 0x400, scoped, tag = 'output window, operand 0, single buffered']
    #allocation3 [shape = 's32[1]{0}', space=sflag, size = 0x4, scoped, tag = 'scoped memory for mlp_forward.1']
    %10 = vsyncpa [#allocation3], 0
    // Predicated region
    $region2: #{mlp_forward.1} parent=1 // pred_check
      _
    $region3: #{mlp_forward.1} parent=1 // pred_check_branch
      %12 = sbr.rel (0) target = $region5
    $region4: #{mlp_forward.1} parent=1 // pred_region
      _
    $region5: #{mlp_forward.1} parent=1 // pred_fallthru
      _
    // Predicated region
    $region6: #{mlp_forward.1} parent=1 // pred_check
      _
    $region7: #{mlp_forward.1} parent=1 // pred_check_branch
      %14 = sbr.rel (0) target = $region9
    $region8: #{mlp_forward.1} parent=1 // pred_region
      _
    $region9: #{mlp_forward.1} parent=1 // pred_fallthru
      _
    // Predicated region
    $region10: #{mlp_forward.1} parent=1 // pred_check
      _
    $region11: #{mlp_forward.1} parent=1 // pred_check_branch
      %16 = sbr.rel (0) target = $region13
    $region12: #{mlp_forward.1} parent=1 // pred_region
      _
    $region13: #{mlp_forward.1} parent=1 // pred_fallthru
      _
    // Predicated region
    $region14: #{mlp_forward.1} parent=1 // pred_check
      _
    $region15: #{mlp_forward.1} parent=1 // pred_check_branch
      %18 = sbr.rel (0) target = $region17
    $region16: #{mlp_forward.1} parent=1 // pred_region
      _
    $region17: #{mlp_forward.1} parent=1 // pred_fallthru
      _
    // Predicated region
    $region18: #{mlp_forward.1} parent=1 // pred_check
      _
    $region19: #{mlp_forward.1} parent=1 // pred_check_branch
      %20 = sbr.rel (0) target = $region21
    $region20: #{mlp_forward.1} parent=1 // pred_region
      _
    $region21: #{mlp_forward.1} parent=1 // pred_fallthru
      _
    %v22 = vld [vmem:[%s0] sm:$0xff]
    %v23 = vld [vmem:[%s0 + $0x8] sm:$0xff]
    %v24 = vld [vmem:[%s1] sm:$0xf]
    %v25 = vld [vmem:[%s1 + $0x4] sm:$0xf]
    %v26 = vld [vmem:[%s1 + $0x8] sm:$0xf]
    %v27 = vld [vmem:[%s1 + $0xc] sm:$0xf]
    %v28 = vld [vmem:[%s1 + $0x10] sm:$0xf]
    %v29 = vld [vmem:[%s1 + $0x14] sm:$0xf]
    %v30 = vld [vmem:[%s1 + $0x18] sm:$0xf]
    %v31 = vld [vmem:[%s1 + $0x1c] sm:$0xf]
    %v32 = vld [vmem:[%s1 + $0x20] sm:$0xf]
    %v33 = vld [vmem:[%s1 + $0x24] sm:$0xf]
    %v34 = vld [vmem:[%s1 + $0x28] sm:$0xf]
    %v35 = vld [vmem:[%s1 + $0x2c] sm:$0xf]
    %v36 = vld [vmem:[%s1 + $0x30] sm:$0xf]
    %v37 = vld [vmem:[%s1 + $0x34] sm:$0xf]
    %v38 = vld [vmem:[%s1 + $0x38] sm:$0xf]
    %v39 = vld [vmem:[%s1 + $0x3c] sm:$0xf]
    %v40 = vld [vmem:[%s1 + $0x40] sm:$0xf]
    %v41 = vld [vmem:[%s1 + $0x44] sm:$0xf]
    %v42 = vld [vmem:[%s1 + $0x48] sm:$0xf]
    %v43 = vld [vmem:[%s1 + $0x4c] sm:$0xf]
    %v44 = vld [vmem:[%s1 + $0x50] sm:$0xf]
    %v45 = vld [vmem:[%s1 + $0x54] sm:$0xf]
    %v46 = vld [vmem:[%s1 + $0x58] sm:$0xf]
    %v47 = vld [vmem:[%s1 + $0x5c] sm:$0xf]
    %v48 = vld [vmem:[%s1 + $0x60] sm:$0xf]
    %v49 = vld [vmem:[%s1 + $0x64] sm:$0xf]
    %v50 = vld [vmem:[%s1 + $0x68] sm:$0xf]
    %v51 = vld [vmem:[%s1 + $0x6c] sm:$0xf]
    %v52 = vld [vmem:[%s1 + $0x70] sm:$0xf]
    %v53 = vld [vmem:[%s1 + $0x74] sm:$0xf]
    %v54 = vld [vmem:[%s1 + $0x78] sm:$0xf]
    %v55 = vld [vmem:[%s1 + $0x7c] sm:$0xf]
    %v56 = vld [vmem:[%s1 + $0x80] sm:$0xf]
    %v57 = vld [vmem:[%s1 + $0x84] sm:$0xf]
    %v58 = vld [vmem:[%s1 + $0x88] sm:$0xf]
    %v59 = vld [vmem:[%s1 + $0x8c] sm:$0xf]
    %v60 = vld [vmem:[%s1 + $0x90] sm:$0xf]
    %v61 = vld [vmem:[%s1 + $0x94] sm:$0xf]
    %v62 = vld [vmem:[%s1 + $0x98] sm:$0xf]
    %v63 = vld [vmem:[%s1 + $0x9c] sm:$0xf]
    %v64 = vld [vmem:[%s1 + $0xa0] sm:$0xf]
    %v65 = vld [vmem:[%s1 + $0xa4] sm:$0xf]
    %v66 = vld [vmem:[%s1 + $0xa8] sm:$0xf]
    %v67 = vld [vmem:[%s1 + $0xac] sm:$0xf]
    %v68 = vld [vmem:[%s1 + $0xb0] sm:$0xf]
    %v69 = vld [vmem:[%s1 + $0xb4] sm:$0xf]
    %v70 = vld [vmem:[%s1 + $0xb8] sm:$0xf]
    %v71 = vld [vmem:[%s1 + $0xbc] sm:$0xf]
    %v72 = vld [vmem:[%s1 + $0xc0] sm:$0xf]
    %v73 = vld [vmem:[%s1 + $0xc4] sm:$0xf]
    %v74 = vld [vmem:[%s1 + $0xc8] sm:$0xf]
    %v75 = vld [vmem:[%s1 + $0xcc] sm:$0xf]
    %v76 = vld [vmem:[%s1 + $0xd0] sm:$0xf]
    %v77 = vld [vmem:[%s1 + $0xd4] sm:$0xf]
    %v78 = vld [vmem:[%s1 + $0xd8] sm:$0xf]
    %v79 = vld [vmem:[%s1 + $0xdc] sm:$0xf]
    %v80 = vld [vmem:[%s1 + $0xe0] sm:$0xf]
    %v81 = vld [vmem:[%s1 + $0xe4] sm:$0xf]
    %v82 = vld [vmem:[%s1 + $0xe8] sm:$0xf]
    %v83 = vld [vmem:[%s1 + $0xec] sm:$0xf]
    %v84 = vld [vmem:[%s1 + $0xf0] sm:$0xf]
    %v85 = vld [vmem:[%s1 + $0xf4] sm:$0xf]
    %v86 = vld [vmem:[%s1 + $0xf8] sm:$0xf]
    %v87 = vld [vmem:[%s1 + $0xfc] sm:$0xf]
    %v88 = vld [vmem:[%s1 + $0x100] sm:$0xf]
    %v89 = vld [vmem:[%s1 + $0x104] sm:$0xf]
    %v90 = vld [vmem:[%s1 + $0x108] sm:$0xf]
    %v91 = vld [vmem:[%s1 + $0x10c] sm:$0xf]
    %v92 = vld [vmem:[%s1 + $0x110] sm:$0xf]
    %v93 = vld [vmem:[%s1 + $0x114] sm:$0xf]
    %v94 = vld [vmem:[%s1 + $0x118] sm:$0xf]
    %v95 = vld [vmem:[%s1 + $0x11c] sm:$0xf]
    %v96 = vld [vmem:[%s1 + $0x120] sm:$0xf]
    %v97 = vld [vmem:[%s1 + $0x124] sm:$0xf]
    %v98 = vld [vmem:[%s1 + $0x128] sm:$0xf]
    %v99 = vld [vmem:[%s1 + $0x12c] sm:$0xf]
    %v100 = vld [vmem:[%s1 + $0x130] sm:$0xf]
    %v101 = vld [vmem:[%s1 + $0x134] sm:$0xf]
    %v102 = vld [vmem:[%s1 + $0x138] sm:$0xf]
    %v103 = vld [vmem:[%s1 + $0x13c] sm:$0xf]
    %v104 = vld [vmem:[%s1 + $0x140] sm:$0xf]
    %v105 = vld [vmem:[%s1 + $0x144] sm:$0xf]
    %v106 = vld [vmem:[%s1 + $0x148] sm:$0xf]
    %v107 = vld [vmem:[%s1 + $0x14c] sm:$0xf]
    %v108 = vld [vmem:[%s1 + $0x150] sm:$0xf]
    %v109 = vld [vmem:[%s1 + $0x154] sm:$0xf]
    %v110 = vld [vmem:[%s1 + $0x158] sm:$0xf]
    %v111 = vld [vmem:[%s1 + $0x15c] sm:$0xf]
    %v112 = vld [vmem:[%s1 + $0x160] sm:$0xf]
    %v113 = vld [vmem:[%s1 + $0x164] sm:$0xf]
    %v114 = vld [vmem:[%s1 + $0x168] sm:$0xf]
    %v115 = vld [vmem:[%s1 + $0x16c] sm:$0xf]
    %v116 = vld [vmem:[%s1 + $0x170] sm:$0xf]
    %v117 = vld [vmem:[%s1 + $0x174] sm:$0xf]
    %v118 = vld [vmem:[%s1 + $0x178] sm:$0xf]
    %v119 = vld [vmem:[%s1 + $0x17c] sm:$0xf]
    %v120 = vld [vmem:[%s1 + $0x180] sm:$0xf]
    %v121 = vld [vmem:[%s1 + $0x184] sm:$0xf]
    %v122 = vld [vmem:[%s1 + $0x188] sm:$0xf]
    %v123 = vld [vmem:[%s1 + $0x18c] sm:$0xf]
    %v124 = vld [vmem:[%s1 + $0x190] sm:$0xf]
    %v125 = vld [vmem:[%s1 + $0x194] sm:$0xf]
    %v126 = vld [vmem:[%s1 + $0x198] sm:$0xf]
    %v127 = vld [vmem:[%s1 + $0x19c] sm:$0xf]
    %v128 = vld [vmem:[%s1 + $0x1a0] sm:$0xf]
    %v129 = vld [vmem:[%s1 + $0x1a4] sm:$0xf]
    %v130 = vld [vmem:[%s1 + $0x1a8] sm:$0xf]
    %v131 = vld [vmem:[%s1 + $0x1ac] sm:$0xf]
    %v132 = vld [vmem:[%s1 + $0x1b0] sm:$0xf]
    %v133 = vld [vmem:[%s1 + $0x1b4] sm:$0xf]
    %v134 = vld [vmem:[%s1 + $0x1b8] sm:$0xf]
    %v135 = vld [vmem:[%s1 + $0x1bc] sm:$0xf]
    %v136 = vld [vmem:[%s1 + $0x1c0] sm:$0xf]
    %v137 = vld [vmem:[%s1 + $0x1c4] sm:$0xf]
    %v138 = vld [vmem:[%s1 + $0x1c8] sm:$0xf]
    %v139 = vld [vmem:[%s1 + $0x1cc] sm:$0xf]
    %v140 = vld [vmem:[%s1 + $0x1d0] sm:$0xf]
    %v141 = vld [vmem:[%s1 + $0x1d4] sm:$0xf]
    %v142 = vld [vmem:[%s1 + $0x1d8] sm:$0xf]
    %v143 = vld [vmem:[%s1 + $0x1dc] sm:$0xf]
    %v144 = vld [vmem:[%s1 + $0x1e0] sm:$0xf]
    %v145 = vld [vmem:[%s1 + $0x1e4] sm:$0xf]
    %v146 = vld [vmem:[%s1 + $0x1e8] sm:$0xf]
    %v147 = vld [vmem:[%s1 + $0x1ec] sm:$0xf]
    %v148 = vld [vmem:[%s1 + $0x1f0] sm:$0xf]
    %v149 = vld [vmem:[%s1 + $0x1f4] sm:$0xf]
    %v150 = vld [vmem:[%s1 + $0x1f8] sm:$0xf]
    %v151 = vld [vmem:[%s1 + $0x1fc] sm:$0xf]
    %v154 = vcombine.high %v22, %v22
    %v156 = vunpack.c.l.s4 1983009808
    %v157 = vunpack.c.0.s8 %v156
    %v158 = vlaneseq
    %v159 = vshrl.u32 %v158, 7
    %v160 = vsub.s32 %v157, %v159
    %v161 = vrot.slane %v22, %v160
    %v163 = vunpack.c.l.s4 1983009808
    %v164 = vunpack.c.0.s8 %v163
    %v165 = vlaneseq
    %v166 = vshrl.u32 %v165, 7
    %v167 = vsub.s32 %v164, %v166
    %v168 = vrot.slane %v154, %v167
    %v169 = vcombine.high %v161, %v161
    %v170 = vcombine.high %v168, %v168
    %v171 = vcombine.high %v23, %v23
    %v173 = vunpack.c.l.s4 1983009808
    %v174 = vunpack.c.0.s8 %v173
    %v175 = vlaneseq
    %v176 = vshrl.u32 %v175, 7
    %v177 = vsub.s32 %v174, %v176
    %v178 = vrot.slane %v23, %v177
    %v180 = vunpack.c.l.s4 1983009808
    %v181 = vunpack.c.0.s8 %v180
    %v182 = vlaneseq
    %v183 = vshrl.u32 %v182, 7
    %v184 = vsub.s32 %v181, %v183
    %v185 = vrot.slane %v171, %v184
    %v186 = vcombine.high %v178, %v178
    %v187 = vcombine.high %v185, %v185
    %v196 = vpack.c.bf16 %v161, %v161
    %v197 = vpack.c.bf16 %v169, %v169
    %v198 = vpack.c.bf16 %v168, %v168
    %v199 = vpack.c.bf16 %v170, %v170
    %v200 = vpack.c.bf16 %v178, %v178
    %v201 = vpack.c.bf16 %v186, %v186
    %v202 = vpack.c.bf16 %v185, %v185
    %v203 = vpack.c.bf16 %v187, %v187
    %v204 = vld [vmem:[%s4] sm:$0x1]
    %v205 = vlaneseq
    %v206 = vshrl.u32 %v205, 7
    %v207 = vsub.s32 0, %v206
    %v208 = vrot.slane %v204, %v207
    %v337 = vunpack.c.l.b16 %v24
    %v338 = vunpack.c.l.b16 %v25
    %v339 = vunpack.c.l.b16 %v26
    %v340 = vunpack.c.l.b16 %v27
    %v341 = vunpack.c.l.b16 %v28
    %v342 = vunpack.c.l.b16 %v29
    %v343 = vunpack.c.l.b16 %v30
    %v344 = vunpack.c.l.b16 %v31
    %v345 = vunpack.c.l.b16 %v32
    %v346 = vunpack.c.l.b16 %v33
    %v347 = vunpack.c.l.b16 %v34
    %v348 = vunpack.c.l.b16 %v35
    %v349 = vunpack.c.l.b16 %v36
    %v350 = vunpack.c.l.b16 %v37
    %v351 = vunpack.c.l.b16 %v38
    %v352 = vunpack.c.l.b16 %v39
    %v353 = vunpack.c.l.b16 %v40
    %v354 = vunpack.c.l.b16 %v41
    %v355 = vunpack.c.l.b16 %v42
    %v356 = vunpack.c.l.b16 %v43
    %v357 = vunpack.c.l.b16 %v44
    %v358 = vunpack.c.l.b16 %v45
    %v359 = vunpack.c.l.b16 %v46
    %v360 = vunpack.c.l.b16 %v47
    %v361 = vunpack.c.l.b16 %v48
    %v362 = vunpack.c.l.b16 %v49
    %v363 = vunpack.c.l.b16 %v50
    %v364 = vunpack.c.l.b16 %v51
    %v365 = vunpack.c.l.b16 %v52
    %v366 = vunpack.c.l.b16 %v53
    %v367 = vunpack.c.l.b16 %v54
    %v368 = vunpack.c.l.b16 %v55
    %v369 = vunpack.c.l.b16 %v56
    %v370 = vunpack.c.l.b16 %v57
    %v371 = vunpack.c.l.b16 %v58
    %v372 = vunpack.c.l.b16 %v59
    %v373 = vunpack.c.l.b16 %v60
    %v374 = vunpack.c.l.b16 %v61
    %v375 = vunpack.c.l.b16 %v62
    %v376 = vunpack.c.l.b16 %v63
    %v377 = vunpack.c.l.b16 %v64
    %v378 = vunpack.c.l.b16 %v65
    %v379 = vunpack.c.l.b16 %v66
    %v380 = vunpack.c.l.b16 %v67
    %v381 = vunpack.c.l.b16 %v68
    %v382 = vunpack.c.l.b16 %v69
    %v383 = vunpack.c.l.b16 %v70
    %v384 = vunpack.c.l.b16 %v71
    %v385 = vunpack.c.l.b16 %v72
    %v386 = vunpack.c.l.b16 %v73
    %v387 = vunpack.c.l.b16 %v74
    %v388 = vunpack.c.l.b16 %v75
    %v389 = vunpack.c.l.b16 %v76
    %v390 = vunpack.c.l.b16 %v77
    %v391 = vunpack.c.l.b16 %v78
    %v392 = vunpack.c.l.b16 %v79
    %v393 = vunpack.c.l.b16 %v80
    %v394 = vunpack.c.l.b16 %v81
    %v395 = vunpack.c.l.b16 %v82
    %v396 = vunpack.c.l.b16 %v83
    %v397 = vunpack.c.l.b16 %v84
    %v398 = vunpack.c.l.b16 %v85
    %v399 = vunpack.c.l.b16 %v86
    %v400 = vunpack.c.l.b16 %v87
    %v401 = vunpack.c.l.b16 %v88
    %v402 = vunpack.c.l.b16 %v89
    %v403 = vunpack.c.l.b16 %v90
    %v404 = vunpack.c.l.b16 %v91
    %v405 = vunpack.c.l.b16 %v92
    %v406 = vunpack.c.l.b16 %v93
    %v407 = vunpack.c.l.b16 %v94
    %v408 = vunpack.c.l.b16 %v95
    %v409 = vunpack.c.l.b16 %v96
    %v410 = vunpack.c.l.b16 %v97
    %v411 = vunpack.c.l.b16 %v98
    %v412 = vunpack.c.l.b16 %v99
    %v413 = vunpack.c.l.b16 %v100
    %v414 = vunpack.c.l.b16 %v101
    %v415 = vunpack.c.l.b16 %v102
    %v416 = vunpack.c.l.b16 %v103
    %v417 = vunpack.c.l.b16 %v104
    %v418 = vunpack.c.l.b16 %v105
    %v419 = vunpack.c.l.b16 %v106
    %v420 = vunpack.c.l.b16 %v107
    %v421 = vunpack.c.l.b16 %v108
    %v422 = vunpack.c.l.b16 %v109
    %v423 = vunpack.c.l.b16 %v110
    %v424 = vunpack.c.l.b16 %v111
    %v425 = vunpack.c.l.b16 %v112
    %v426 = vunpack.c.l.b16 %v113
    %v427 = vunpack.c.l.b16 %v114
    %v428 = vunpack.c.l.b16 %v115
    %v429 = vunpack.c.l.b16 %v116
    %v430 = vunpack.c.l.b16 %v117
    %v431 = vunpack.c.l.b16 %v118
    %v432 = vunpack.c.l.b16 %v119
    %v433 = vunpack.c.l.b16 %v120
    %v434 = vunpack.c.l.b16 %v121
    %v435 = vunpack.c.l.b16 %v122
    %v436 = vunpack.c.l.b16 %v123
    %v437 = vunpack.c.l.b16 %v124
    %v438 = vunpack.c.l.b16 %v125
    %v439 = vunpack.c.l.b16 %v126
    %v440 = vunpack.c.l.b16 %v127
    %v441 = vunpack.c.l.b16 %v128
    %v442 = vunpack.c.l.b16 %v129
    %v443 = vunpack.c.l.b16 %v130
    %v444 = vunpack.c.l.b16 %v131
    %v445 = vunpack.c.l.b16 %v132
    %v446 = vunpack.c.l.b16 %v133
    %v447 = vunpack.c.l.b16 %v134
    %v448 = vunpack.c.l.b16 %v135
    %v449 = vunpack.c.l.b16 %v136
    %v450 = vunpack.c.l.b16 %v137
    %v451 = vunpack.c.l.b16 %v138
    %v452 = vunpack.c.l.b16 %v139
    %v453 = vunpack.c.l.b16 %v140
    %v454 = vunpack.c.l.b16 %v141
    %v455 = vunpack.c.l.b16 %v142
    %v456 = vunpack.c.l.b16 %v143
    %v457 = vunpack.c.l.b16 %v144
    %v458 = vunpack.c.l.b16 %v145
    %v459 = vunpack.c.l.b16 %v146
    %v460 = vunpack.c.l.b16 %v147
    %v461 = vunpack.c.l.b16 %v148
    %v462 = vunpack.c.l.b16 %v149
    %v463 = vunpack.c.l.b16 %v150
    %v464 = vunpack.c.l.b16 %v151
    %v465 = vpack.c.b16 %v338, %v337
    %v466 = vpack.c.b16 %v340, %v339
    %v467 = vpack.c.b16 %v342, %v341
    %v468 = vpack.c.b16 %v344, %v343
    %v469 = vpack.c.b16 %v346, %v345
    %v470 = vpack.c.b16 %v348, %v347
    %v471 = vpack.c.b16 %v350, %v349
    %v472 = vpack.c.b16 %v352, %v351
    %v473 = vpack.c.b16 %v354, %v353
    %v474 = vpack.c.b16 %v356, %v355
    %v475 = vpack.c.b16 %v358, %v357
    %v476 = vpack.c.b16 %v360, %v359
    %v477 = vpack.c.b16 %v362, %v361
    %v478 = vpack.c.b16 %v364, %v363
    %v479 = vpack.c.b16 %v366, %v365
    %v480 = vpack.c.b16 %v368, %v367
    %v481 = vpack.c.b16 %v370, %v369
    %v482 = vpack.c.b16 %v372, %v371
    %v483 = vpack.c.b16 %v374, %v373
    %v484 = vpack.c.b16 %v376, %v375
    %v485 = vpack.c.b16 %v378, %v377
    %v486 = vpack.c.b16 %v380, %v379
    %v487 = vpack.c.b16 %v382, %v381
    %v488 = vpack.c.b16 %v384, %v383
    %v489 = vpack.c.b16 %v386, %v385
    %v490 = vpack.c.b16 %v388, %v387
    %v491 = vpack.c.b16 %v390, %v389
    %v492 = vpack.c.b16 %v392, %v391
    %v493 = vpack.c.b16 %v394, %v393
    %v494 = vpack.c.b16 %v396, %v395
    %v495 = vpack.c.b16 %v398, %v397
    %v496 = vpack.c.b16 %v400, %v399
    %v497 = vpack.c.b16 %v402, %v401
    %v498 = vpack.c.b16 %v404, %v403
    %v499 = vpack.c.b16 %v406, %v405
    %v500 = vpack.c.b16 %v408, %v407
    %v501 = vpack.c.b16 %v410, %v409
    %v502 = vpack.c.b16 %v412, %v411
    %v503 = vpack.c.b16 %v414, %v413
    %v504 = vpack.c.b16 %v416, %v415
    %v505 = vpack.c.b16 %v418, %v417
    %v506 = vpack.c.b16 %v420, %v419
    %v507 = vpack.c.b16 %v422, %v421
    %v508 = vpack.c.b16 %v424, %v423
    %v509 = vpack.c.b16 %v426, %v425
    %v510 = vpack.c.b16 %v428, %v427
    %v511 = vpack.c.b16 %v430, %v429
    %v512 = vpack.c.b16 %v432, %v431
    %v513 = vpack.c.b16 %v434, %v433
    %v514 = vpack.c.b16 %v436, %v435
    %v515 = vpack.c.b16 %v438, %v437
    %v516 = vpack.c.b16 %v440, %v439
    %v517 = vpack.c.b16 %v442, %v441
    %v518 = vpack.c.b16 %v444, %v443
    %v519 = vpack.c.b16 %v446, %v445
    %v520 = vpack.c.b16 %v448, %v447
    %v521 = vpack.c.b16 %v450, %v449
    %v522 = vpack.c.b16 %v452, %v451
    %v523 = vpack.c.b16 %v454, %v453
    %v524 = vpack.c.b16 %v456, %v455
    %v525 = vpack.c.b16 %v458, %v457
    %v526 = vpack.c.b16 %v460, %v459
    %v527 = vpack.c.b16 %v462, %v461
    %v528 = vpack.c.b16 %v464, %v463
    %593 = vmatprep.subr.bf16.mxu0 0
    %594 = vmatpush1.bf16.msra.mxu0 %v465
    %595 = vmatprep.subr.bf16.mxu0 0
    %596 = vmatpush1.bf16.msra.mxu0 %v466
    %597 = vmatprep.subr.bf16.mxu0 0
    %598 = vmatpush1.bf16.msra.mxu0 %v467
    %599 = vmatprep.subr.bf16.mxu0 0
    %600 = vmatpush1.bf16.msra.mxu0 %v468
    %601 = vmatprep.subr.bf16.mxu0 0
    %602 = vmatpush1.bf16.msra.mxu0 %v469
    %603 = vmatprep.subr.bf16.mxu0 0
    %604 = vmatpush1.bf16.msra.mxu0 %v470
    %605 = vmatprep.subr.bf16.mxu0 0
    %606 = vmatpush1.bf16.msra.mxu0 %v471
    %607 = vmatprep.subr.bf16.mxu0 0
    %608 = vmatpush1.bf16.msra.mxu0 %v472
    %609 = vmatprep.subr.bf16.mxu0 0
    %610 = vmatpush1.bf16.msra.mxu0 %v473
    %611 = vmatprep.subr.bf16.mxu0 0
    %612 = vmatpush1.bf16.msra.mxu0 %v474
    %613 = vmatprep.subr.bf16.mxu0 0
    %614 = vmatpush1.bf16.msra.mxu0 %v475
    %615 = vmatprep.subr.bf16.mxu0 0
    %616 = vmatpush1.bf16.msra.mxu0 %v476
    %617 = vmatprep.subr.bf16.mxu0 0
    %618 = vmatpush1.bf16.msra.mxu0 %v477
    %619 = vmatprep.subr.bf16.mxu0 0
    %620 = vmatpush1.bf16.msra.mxu0 %v478
    %621 = vmatprep.subr.bf16.mxu0 0
    %622 = vmatpush1.bf16.msra.mxu0 %v479
    %623 = vmatprep.subr.bf16.mxu0 0
    %624 = vmatpush1.bf16.msra.mxu0 %v480
    %625 = vmatprep.mubr.bf16.mxu0 %v197
    %626 = vmatmul.mubr.bf16.gmra.mrb[0].mxu0 %v196
    %v627 = vpop.f32.mrb[0].mxu0
    %v628 = vadd.f32 %v208, %v627
    %v629 = vpop.f32.mrb[0].mxu0
    %v630 = vpop.f32.mrb[0].mxu0
    %v631 = vpop.f32.mrb[0].mxu0
    %632 = vdwg.mxu0
    %633 = vmatprep.subr.bf16.mxu0 0
    %634 = vmatpush1.bf16.msra.mxu0 %v481
    %635 = vmatprep.subr.bf16.mxu0 0
    %636 = vmatpush1.bf16.msra.mxu0 %v482
    %637 = vmatprep.subr.bf16.mxu0 0
    %638 = vmatpush1.bf16.msra.mxu0 %v483
    %639 = vmatprep.subr.bf16.mxu0 0
    %640 = vmatpush1.bf16.msra.mxu0 %v484
    %641 = vmatprep.subr.bf16.mxu0 0
    %642 = vmatpush1.bf16.msra.mxu0 %v485
    %643 = vmatprep.subr.bf16.mxu0 0
    %644 = vmatpush1.bf16.msra.mxu0 %v486
    %645 = vmatprep.subr.bf16.mxu0 0
    %646 = vmatpush1.bf16.msra.mxu0 %v487
    %647 = vmatprep.subr.bf16.mxu0 0
    %648 = vmatpush1.bf16.msra.mxu0 %v488
    %649 = vmatprep.subr.bf16.mxu0 0
    %650 = vmatpush1.bf16.msra.mxu0 %v489
    %651 = vmatprep.subr.bf16.mxu0 0
    %652 = vmatpush1.bf16.msra.mxu0 %v490
    %653 = vmatprep.subr.bf16.mxu0 0
    %654 = vmatpush1.bf16.msra.mxu0 %v491
    %655 = vmatprep.subr.bf16.mxu0 0
    %656 = vmatpush1.bf16.msra.mxu0 %v492
    %657 = vmatprep.subr.bf16.mxu0 0
    %658 = vmatpush1.bf16.msra.mxu0 %v493
    %659 = vmatprep.subr.bf16.mxu0 0
    %660 = vmatpush1.bf16.msra.mxu0 %v494
    %661 = vmatprep.subr.bf16.mxu0 0
    %662 = vmatpush1.bf16.msra.mxu0 %v495
    %663 = vmatprep.subr.bf16.mxu0 0
    %664 = vmatpush1.bf16.msra.mxu0 %v496
    %665 = vmatprep.mubr.bf16.mxu0 %v199
    %666 = vmatmul.mubr.bf16.gmra.mrb[0].mxu0 %v198
    %v667 = vpop.f32.mrb[0].mxu0
    %v668 = vadd.f32 %v628, %v667
    %v669 = vpop.f32.mrb[0].mxu0
    %v670 = vpop.f32.mrb[0].mxu0
    %v671 = vpop.f32.mrb[0].mxu0
    %672 = vdwg.mxu0
    %673 = vmatprep.subr.bf16.mxu0 0
    %674 = vmatpush1.bf16.msra.mxu0 %v497
    %675 = vmatprep.subr.bf16.mxu0 0
    %676 = vmatpush1.bf16.msra.mxu0 %v498
    %677 = vmatprep.subr.bf16.mxu0 0
    %678 = vmatpush1.bf16.msra.mxu0 %v499
    %679 = vmatprep.subr.bf16.mxu0 0
    %680 = vmatpush1.bf16.msra.mxu0 %v500
    %681 = vmatprep.subr.bf16.mxu0 0
    %682 = vmatpush1.bf16.msra.mxu0 %v501
    %683 = vmatprep.subr.bf16.mxu0 0
    %684 = vmatpush1.bf16.msra.mxu0 %v502
    %685 = vmatprep.subr.bf16.mxu0 0
    %686 = vmatpush1.bf16.msra.mxu0 %v503
    %687 = vmatprep.subr.bf16.mxu0 0
    %688 = vmatpush1.bf16.msra.mxu0 %v504
    %689 = vmatprep.subr.bf16.mxu0 0
    %690 = vmatpush1.bf16.msra.mxu0 %v505
    %691 = vmatprep.subr.bf16.mxu0 0
    %692 = vmatpush1.bf16.msra.mxu0 %v506
    %693 = vmatprep.subr.bf16.mxu0 0
    %694 = vmatpush1.bf16.msra.mxu0 %v507
    %695 = vmatprep.subr.bf16.mxu0 0
    %696 = vmatpush1.bf16.msra.mxu0 %v508
    %697 = vmatprep.subr.bf16.mxu0 0
    %698 = vmatpush1.bf16.msra.mxu0 %v509
    %699 = vmatprep.subr.bf16.mxu0 0
    %700 = vmatpush1.bf16.msra.mxu0 %v510
    %701 = vmatprep.subr.bf16.mxu0 0
    %702 = vmatpush1.bf16.msra.mxu0 %v511
    %703 = vmatprep.subr.bf16.mxu0 0
    %704 = vmatpush1.bf16.msra.mxu0 %v512
    %705 = vmatprep.mubr.bf16.mxu0 %v201
    %706 = vmatmul.mubr.bf16.gmra.mrb[0].mxu0 %v200
    %v707 = vpop.f32.mrb[0].mxu0
    %v708 = vadd.f32 %v668, %v707
    %v709 = vpop.f32.mrb[0].mxu0
    %v710 = vpop.f32.mrb[0].mxu0
    %v711 = vpop.f32.mrb[0].mxu0
    %712 = vdwg.mxu0
    %713 = vmatprep.subr.bf16.mxu0 0
    %714 = vmatpush1.bf16.msra.mxu0 %v513
    %715 = vmatprep.subr.bf16.mxu0 0
    %716 = vmatpush1.bf16.msra.mxu0 %v514
    %717 = vmatprep.subr.bf16.mxu0 0
    %718 = vmatpush1.bf16.msra.mxu0 %v515
    %719 = vmatprep.subr.bf16.mxu0 0
    %720 = vmatpush1.bf16.msra.mxu0 %v516
    %721 = vmatprep.subr.bf16.mxu0 0
    %722 = vmatpush1.bf16.msra.mxu0 %v517
    %723 = vmatprep.subr.bf16.mxu0 0
    %724 = vmatpush1.bf16.msra.mxu0 %v518
    %725 = vmatprep.subr.bf16.mxu0 0
    %726 = vmatpush1.bf16.msra.mxu0 %v519
    %727 = vmatprep.subr.bf16.mxu0 0
    %728 = vmatpush1.bf16.msra.mxu0 %v520
    %729 = vmatprep.subr.bf16.mxu0 0
    %730 = vmatpush1.bf16.msra.mxu0 %v521
    %731 = vmatprep.subr.bf16.mxu0 0
    %732 = vmatpush1.bf16.msra.mxu0 %v522
    %733 = vmatprep.subr.bf16.mxu0 0
    %734 = vmatpush1.bf16.msra.mxu0 %v523
    %735 = vmatprep.subr.bf16.mxu0 0
    %736 = vmatpush1.bf16.msra.mxu0 %v524
    %737 = vmatprep.subr.bf16.mxu0 0
    %738 = vmatpush1.bf16.msra.mxu0 %v525
    %739 = vmatprep.subr.bf16.mxu0 0
    %740 = vmatpush1.bf16.msra.mxu0 %v526
    %741 = vmatprep.subr.bf16.mxu0 0
    %742 = vmatpush1.bf16.msra.mxu0 %v527
    %743 = vmatprep.subr.bf16.mxu0 0
    %744 = vmatpush1.bf16.msra.mxu0 %v528
    %745 = vmatprep.mubr.bf16.mxu0 %v203
    %746 = vmatmul.mubr.bf16.gmra.mrb[0].mxu0 %v202
    %v747 = vpop.f32.mrb[0].mxu0
    %v748 = vadd.f32 %v708, %v747
    %v749 = vpop.f32.mrb[0].mxu0
    %v750 = vpop.f32.mrb[0].mxu0
    %v751 = vpop.f32.mrb[0].mxu0
    %752 = vdwg.mxu0
    %v753 = vmax.f32 %v748, 0.0
    %v754 = vld [vmem:[%s2] sm:$0xf]
    %v755 = vld [vmem:[%s2 + $0x4] sm:$0xf]
    %v756 = vld [vmem:[%s2 + $0x8] sm:$0xf]
    %v757 = vld [vmem:[%s2 + $0xc] sm:$0xf]
    %v758 = vpack.c.bf16 %v753, %v753
    %v759 = vld [vmem:[%s4 + $0x1] sm:$0x1]
    %v760 = vlaneseq
    %v761 = vshrl.u32 %v760, 7
    %v762 = vsub.s32 0, %v761
    %v763 = vrot.slane %v759, %v762
    %v768 = vunpack.c.l.b16 %v754
    %v769 = vunpack.c.l.b16 %v755
    %v770 = vunpack.c.l.b16 %v756
    %v771 = vunpack.c.l.b16 %v757
    %v772 = vpack.c.b16 %v769, %v768
    %v773 = vpack.c.b16 %v771, %v770
    %vm776 = vcmask 261120
    %v778 = vsel %vm776, %v758, 0
    %780 = vmatprep.subr.bf16.mxu0 0
    %781 = vmatpush1.bf16.msra.mxu0 %v772
    %782 = vmatprep.subr.bf16.mxu0 0
    %783 = vmatpush1.bf16.msra.mxu0 %v773
    %784 = vmatprep.subr.bf16.mxu0 0
    %785 = vmatpush1.bf16.msra.mxu0 0
    %786 = vmatprep.subr.bf16.mxu0 0
    %787 = vmatpush1.bf16.msra.mxu0 0
    %788 = vmatprep.subr.bf16.mxu0 0
    %789 = vmatpush1.bf16.msra.mxu0 0
    %790 = vmatprep.subr.bf16.mxu0 0
    %791 = vmatpush1.bf16.msra.mxu0 0
    %792 = vmatprep.subr.bf16.mxu0 0
    %793 = vmatpush1.bf16.msra.mxu0 0
    %794 = vmatprep.subr.bf16.mxu0 0
    %795 = vmatpush1.bf16.msra.mxu0 0
    %796 = vmatprep.subr.bf16.mxu0 0
    %797 = vmatpush1.bf16.msra.mxu0 0
    %798 = vmatprep.subr.bf16.mxu0 0
    %799 = vmatpush1.bf16.msra.mxu0 0
    %800 = vmatprep.subr.bf16.mxu0 0
    %801 = vmatpush1.bf16.msra.mxu0 0
    %802 = vmatprep.subr.bf16.mxu0 0
    %803 = vmatpush1.bf16.msra.mxu0 0
    %804 = vmatprep.subr.bf16.mxu0 0
    %805 = vmatpush1.bf16.msra.mxu0 0
    %806 = vmatprep.subr.bf16.mxu0 0
    %807 = vmatpush1.bf16.msra.mxu0 0
    %808 = vmatprep.subr.bf16.mxu0 0
    %809 = vmatpush1.bf16.msra.mxu0 0
    %810 = vmatprep.subr.bf16.mxu0 0
    %811 = vmatpush1.bf16.msra.mxu0 0
    %812 = vmatprep.mubr.bf16.mxu0 0
    %813 = vmatmul.mubr.bf16.gmra.mrb[0].mxu0 %v778
    %v814 = vpop.f32.mrb[0].mxu0
    %v815 = vadd.f32 %v763, %v814
    %v816 = vpop.f32.mrb[0].mxu0
    %v817 = vpop.f32.mrb[0].mxu0
    %v818 = vpop.f32.mrb[0].mxu0
    %819 = vdwg.mxu0
    %v820 = vmax.f32 %v815, 0.0
    %v821 = vld [vmem:[%s3] sm:$0xf]
    %v822 = vld [vmem:[%s3 + $0x4] sm:$0xf]
    %v823 = vld [vmem:[%s3 + $0x8] sm:$0xf]
    %v824 = vld [vmem:[%s3 + $0xc] sm:$0xf]
    %v825 = vpack.c.bf16 %v820, %v820
    %v826 = vld [vmem:[%s4 + $0x2] sm:$0x1]
    %v827 = vlaneseq
    %v828 = vshrl.u32 %v827, 7
    %v829 = vsub.s32 0, %v828
    %v830 = vrot.slane %v826, %v829
    %v835 = vunpack.c.l.b16 %v821
    %v836 = vunpack.c.l.b16 %v822
    %v837 = vunpack.c.l.b16 %v823
    %v838 = vunpack.c.l.b16 %v824
    %v839 = vpack.c.b16 %v836, %v835
    %v840 = vpack.c.b16 %v838, %v837
    %v844 = vsel %vm776, %v825, 0
    %846 = vmatprep.subr.bf16.mxu0 0
    %847 = vmatpush1.bf16.msra.mxu0 %v839
    %848 = vmatprep.subr.bf16.mxu0 0
    %849 = vmatpush1.bf16.msra.mxu0 %v840
    %850 = vmatprep.subr.bf16.mxu0 0
    %851 = vmatpush1.bf16.msra.mxu0 0
    %852 = vmatprep.subr.bf16.mxu0 0
    %853 = vmatpush1.bf16.msra.mxu0 0
    %854 = vmatprep.subr.bf16.mxu0 0
    %855 = vmatpush1.bf16.msra.mxu0 0
    %856 = vmatprep.subr.bf16.mxu0 0
    %857 = vmatpush1.bf16.msra.mxu0 0
    %858 = vmatprep.subr.bf16.mxu0 0
    %859 = vmatpush1.bf16.msra.mxu0 0
    %860 = vmatprep.subr.bf16.mxu0 0
    %861 = vmatpush1.bf16.msra.mxu0 0
    %862 = vmatprep.subr.bf16.mxu0 0
    %863 = vmatpush1.bf16.msra.mxu0 0
    %864 = vmatprep.subr.bf16.mxu0 0
    %865 = vmatpush1.bf16.msra.mxu0 0
    %866 = vmatprep.subr.bf16.mxu0 0
    %867 = vmatpush1.bf16.msra.mxu0 0
    %868 = vmatprep.subr.bf16.mxu0 0
    %869 = vmatpush1.bf16.msra.mxu0 0
    %870 = vmatprep.subr.bf16.mxu0 0
    %871 = vmatpush1.bf16.msra.mxu0 0
    %872 = vmatprep.subr.bf16.mxu0 0
    %873 = vmatpush1.bf16.msra.mxu0 0
    %874 = vmatprep.subr.bf16.mxu0 0
    %875 = vmatpush1.bf16.msra.mxu0 0
    %876 = vmatprep.subr.bf16.mxu0 0
    %877 = vmatpush1.bf16.msra.mxu0 0
    %878 = vmatprep.mubr.bf16.mxu0 0
    %879 = vmatmul.mubr.bf16.gmra.mrb[0].mxu0 %v844
    %v880 = vpop.f32.mrb[0].mxu0
    %v881 = vadd.f32 %v830, %v880
    %v882 = vpop.f32.mrb[0].mxu0
    %v883 = vpop.f32.mrb[0].mxu0
    %v884 = vpop.f32.mrb[0].mxu0
    %885 = vdwg.mxu0
    %vm886 = vcmask 58368
    %887 = vst.msk [vmem:[#allocation2] sm:$0x3] %vm886, %v881
    // Predicated region
    $region22: #{mlp_forward.1} parent=1 // pred_check
      _
    $region23: #{mlp_forward.1} parent=1 // pred_check_branch
      %889 = sbr.rel (0) target = $region25
    $region24: #{mlp_forward.1} parent=1 // pred_region
      %s891 = ssub.s32 32, 32
      %892 = vsyncadd [#allocation3], %s891
      %s894 = sshll.u32 [#allocation2], 4
      %s895 = int_to_ptr.vmem [resolvable:$true] %s894
      %897 = dma.vmem_to_hbm [thread:$0]  %s895, 32, %s5, [#allocation3]
    $region25: #{mlp_forward.1} parent=1 // pred_fallthru
      _
    // Predicated region
    $region26: #{mlp_forward.1} parent=1 // pred_check
      _
    $region27: #{mlp_forward.1} parent=1 // pred_check_branch
      %899 = sbr.rel (0) target = $region29
    $region28: #{mlp_forward.1} parent=1 // pred_region
      %900 = dma.done [#allocation3], 32
    $region29: #{mlp_forward.1} parent=1 // pred_fallthru
      _
    %901 = vsyncpa [#allocation3], 1

</llo_original>
